<compile_context>
chip_gen: v6e
topology: v6e:2x2x1
jax: 0.10.0
libtpu: 0.0.40
codegen_flags: <defaults>
</compile_context>

<pallas_src>
import functools

import jax
import jax.numpy as jnp
from jax.experimental import pallas as pl
from jax.experimental.pallas import tpu as pltpu


def _round_up(n, m):
    return ((n + m - 1) // m) * m


def _fold_factor(dim_in, dim_out, num_layer):
    """Number of consecutive rows folded into the lane dimension.

    Keeps the streamed input (pack*dim_in bf16 lanes) and output (pack*dim_out f32 lanes)
    lane-dense while bounding the pack-fold MXU-work inflation so even v5e (~240 flop per
    HBM byte) remains HBM-bound (target <= ~160 flop/byte).
    """
    bytes_per_row = dim_in * 2 + dim_out * 4              # bf16 in, f32 out
    flops_per_row = 2 * num_layer * dim_in * dim_in + 2 * dim_in * dim_out
    pack = 1
    while (pack < 8
           and 2 * pack * dim_in <= 512                    # folded input stays a few vregs wide
           and 2 * pack * flops_per_row <= 160 * bytes_per_row):
        pack *= 2
    return pack


def _mlp_kernel(x_ref, wh_ref, bh_ref, wo_ref, bo_ref, o_ref, *, num_layer):
    # x_ref : (TMF, pack*dim_in)               bf16 folded activation tile (lane-dense)
    # wh_ref: (L, pack*dim_in, pack*dim_in)    bf16 block-diag hidden weights, VMEM-resident
    # bh_ref: (L, 1, pack*dim_in)              f32 tiled hidden biases
    # wo_ref: (pack*dim_in, pack*dim_out)      bf16 block-diag output weight
    # bo_ref: (1, pack*dim_out)                f32 tiled output bias
    # o_ref : (TMF, pack*dim_out)              f32 folded output tile (lane-dense store)
    h = x_ref[...]
    for l in range(num_layer):                 # static unroll over layers
        z = jnp.dot(h, wh_ref[l], preferred_element_type=jnp.float32)
        z = jnp.maximum(z + bh_ref[l], 0.0)    # bias + ReLU in f32 (v5e-safe)
        h = z.astype(x_ref.dtype)              # back to bf16 for the next MXU pass
    # dropout -> identity (eval mode)
    y = jnp.dot(h, wo_ref[...], preferred_element_type=jnp.float32) + bo_ref[...]
    o_ref[...] = y.astype(o_ref.dtype)


def mlp_forward(x, hidden_w, hidden_b, out_w, out_b, *, row_tile=8192):
    """x: (..., dim_in) float32. hidden_w: (L, dim_in, dim_in) pre-transposed (in x out).
    hidden_b: (L, dim_in). out_w: (dim_in, dim_out). out_b: (dim_out,).
    Returns (..., dim_out) float32."""
    num_layer, dim_in, _ = hidden_w.shape
    dim_out = out_w.shape[1]
    lead = x.shape[:-1]
    m = 1
    for d in lead:
        m *= d

    pack = _fold_factor(dim_in, dim_out, num_layer)
    dif = pack * dim_in                        # folded (lane) input width
    dof = pack * dim_out                       # folded (lane) output width

    # Row-tile selection (in original-row units). row_mult keeps the folded block's
    # sublane dim a multiple of 16 (bf16-friendly, satisfies the (8,128) block rule).
    row_mult = 16 * pack
    m_ceil = _round_up(max(m, 1), row_mult)
    tm = min(_round_up(row_tile, row_mult), m_ceil)
    # v7x megacore: if everything fits one step but the problem is big, use >=2 steps
    # so the "parallel" row axis actually splits across both TensorCores.
    if m_ceil >= 1024 and m_ceil <= tm:
        tm = _round_up(pl.cdiv(m_ceil, 2), row_mult)
    m_pad = _round_up(m_ceil, tm)
    tmf = tm // pack                           # folded rows per tile

    cdt = jnp.bfloat16
    x2d = x.reshape(m, dim_in).astype(cdt)
    if m_pad != m:
        x2d = jnp.pad(x2d, ((0, m_pad - m), (0, 0)))
    x_fold = x2d.reshape(m_pad // pack, dif)   # free row-major fold: pack rows -> lanes

    # Block-diagonal (kron) parameters: per folded row, lane group q holds original row
    # r*pack+q, and kron(I_pack, W) applies W independently to each group.
    eye = jnp.eye(pack, dtype=jnp.float32)
    wh_f = jnp.stack([jnp.kron(eye, hidden_w[l]) for l in range(num_layer)]).astype(cdt)
    bh_f = jnp.tile(hidden_b.reshape(num_layer, 1, dim_in).astype(jnp.float32),
                    (1, 1, pack))
    wo_f = jnp.kron(eye, out_w).astype(cdt)
    bo_f = jnp.tile(out_b.reshape(1, dim_out).astype(jnp.float32), (1, pack))

    kernel = functools.partial(_mlp_kernel, num_layer=num_layer)

    mf = m_pad // pack
    flops = 2 * mf * (num_layer * dif * dif + dif * dof)
    bytes_accessed = (x_fold.size * 2 + mf * dof * 4        # streamed activations in / out
                      + wh_f.size * 2 + bh_f.size * 4       # resident params
                      + wo_f.size * 2 + bo_f.size * 4)

    out_fold = pl.pallas_call(
        kernel,
        out_shape=jax.ShapeDtypeStruct((mf, dof), jnp.float32),
        grid=(m_pad // tm,),
        in_specs=[
            pl.BlockSpec((tmf, dif), lambda i: (i, 0)),                     # x tile (streamed)
            pl.BlockSpec((num_layer, dif, dif), lambda i: (0, 0, 0)),       # resident
            pl.BlockSpec((num_layer, 1, dif), lambda i: (0, 0, 0)),         # resident
            pl.BlockSpec((dif, dof), lambda i: (0, 0)),                     # resident
            pl.BlockSpec((1, dof), lambda i: (0, 0)),                       # resident
        ],
        out_specs=pl.BlockSpec((tmf, dof), lambda i: (i, 0)),
        compiler_params=pltpu.CompilerParams(
            dimension_semantics=("parallel",),
            vmem_limit_bytes=32 * 1024 * 1024),
        cost_estimate=pl.CostEstimate(
            flops=flops, transcendentals=0, bytes_accessed=bytes_accessed),
    )(x_fold, wh_f, bh_f, wo_f, bo_f)

    out2d = out_fold.reshape(m_pad, dim_out)[:m]            # free unfold + drop padded rows
    return out2d.reshape(*lead, dim_out)


def _reference(x, hidden_w, hidden_b, out_w, out_b):
    h = x
    for l in range(hidden_w.shape[0]):
        h = jnp.maximum(h @ hidden_w[l] + hidden_b[l], 0.0)
    return h @ out_w + out_b


if __name__ == "__main__":
    num_layer, dim_in, dim_out = 2, 32, 16

    key = jax.random.PRNGKey(0)
    kw, kb, kwo, kbo, kx1, kx2, kx3 = jax.random.split(key, 7)

    # Deterministic parameter init (PyTorch-Linear-like uniform scale),
    # stored pre-transposed as (in, out) so the kernel computes y = x @ W + b.
    bound_h = 1.0 / jnp.sqrt(dim_in)
    hidden_w = jax.random.uniform(kw, (num_layer, dim_in, dim_in), jnp.float32,
                                  -bound_h, bound_h)
    hidden_b = jax.random.uniform(kb, (num_layer, dim_in), jnp.float32,
                                  -bound_h, bound_h)
    out_w = jax.random.uniform(kwo, (dim_in, dim_out), jnp.float32,
                               -bound_h, bound_h)
    out_b = jax.random.uniform(kbo, (dim_out,), jnp.float32, -bound_h, bound_h)

    # Case 1: small shapes consistent with the module (single grid step, tiny tile).
    # Case 2: non-multiple row count -> exercises row padding.
    # Case 3: 2048 rows -> exercises the >=2-step split (v7x megacore) path.
    cases = [
        jax.random.normal(kx1, (2, 8, dim_in), dtype=jnp.float32),
        jax.random.normal(kx2, (3, 300, dim_in), dtype=jnp.float32),
        jax.random.normal(kx3, (8, 256, dim_in), dtype=jnp.float32),
    ]

    for x in cases:
        y = mlp_forward(x, hidden_w, hidden_b, out_w, out_b)
        y = jax.block_until_ready(y)
        y_ref = _reference(x, hidden_w, hidden_b, out_w, out_b)
        assert y.shape == x.shape[:-1] + (dim_out,)
        # bf16 MXU inputs with f32 accumulation -> relaxed tolerance vs the pure-f32 reference.
        assert jnp.allclose(y, y_ref, atol=5e-2, rtol=5e-2), "mismatch vs reference"

    print("KERNEL_OK")
</pallas_src>

<mosaic_0001>
module attributes {stable_mosaic.version = 11 : i64} {
  func.func @_mlp_kernel(%arg0: i32, %arg1: memref<16x128xbf16, #tpu.memory_space<vmem>>, %arg2: memref<2x128x128xbf16, #tpu.memory_space<vmem>>, %arg3: memref<2x1x128xf32, #tpu.memory_space<vmem>>, %arg4: memref<128x64xbf16, #tpu.memory_space<vmem>>, %arg5: memref<1x64xf32, #tpu.memory_space<vmem>>, %arg6: memref<16x64xf32, #tpu.memory_space<vmem>>) attributes {dimension_semantics = [#tpu.dimension_semantics<parallel>], iteration_bounds = array<i64: 1>, scalar_prefetch = 0 : i64, scratch_operands = 0 : i64, tpu.core_type = #tpu.core_type<tc>, window_params = [{transform_indices = @transform_0, window_bounds = array<i64: 16, 128>}, {pipeline_mode = #tpu.pipeline_mode<synchronous>, transform_indices = @transform_1, window_bounds = array<i64: 2, 128, 128>}, {pipeline_mode = #tpu.pipeline_mode<synchronous>, transform_indices = @transform_2, window_bounds = array<i64: 2, 1, 128>}, {pipeline_mode = #tpu.pipeline_mode<synchronous>, transform_indices = @transform_3, window_bounds = array<i64: 128, 64>}, {pipeline_mode = #tpu.pipeline_mode<synchronous>, transform_indices = @transform_4, window_bounds = array<i64: 1, 64>}, {transform_indices = @transform_5, window_bounds = array<i64: 16, 64>}]} {
    %c0 = arith.constant 0 : index
    %c0_0 = arith.constant 0 : index
    %0 = vector.load %arg1[%c0, %c0_0] : memref<16x128xbf16, #tpu.memory_space<vmem>>, vector<16x128xbf16>
    %c0_1 = arith.constant 0 : index
    %c0_2 = arith.constant 0 : index
    %c0_3 = arith.constant 0 : index
    %1 = vector.load %arg2[%c0_1, %c0_2, %c0_3] : memref<2x128x128xbf16, #tpu.memory_space<vmem>>, vector<1x128x128xbf16>
    %2 = vector.shape_cast %1 : vector<1x128x128xbf16> to vector<128x128xbf16>
    %cst = arith.constant dense<0.000000e+00> : vector<16x128xf32>
    %3 = tpu.matmul %0, %2, %cst {dimension_numbers = #tpu.dot_dimension_numbers<[1], [0], [0], [1], [0, 0, 1, 1], [], []>} : vector<16x128xbf16>, vector<128x128xbf16>, vector<16x128xf32> -> vector<16x128xf32>
    %c0_4 = arith.constant 0 : index
    %c0_5 = arith.constant 0 : index
    %c0_6 = arith.constant 0 : index
    %4 = vector.load %arg3[%c0_4, %c0_5, %c0_6] : memref<2x1x128xf32, #tpu.memory_space<vmem>>, vector<1x1x128xf32>
    %5 = vector.shape_cast %4 : vector<1x1x128xf32> to vector<1x128xf32>
    %6 = vector.broadcast %5 : vector<1x128xf32> to vector<16x128xf32>
    %7 = arith.addf %3, %6 : vector<16x128xf32>
    %cst_7 = arith.constant 0.000000e+00 : f32
    %8 = vector.broadcast %cst_7 : f32 to vector<16x128xf32>
    %9 = arith.maximumf %7, %8 : vector<16x128xf32>
    %10 = arith.truncf %9 : vector<16x128xf32> to vector<16x128xbf16>
    %c1 = arith.constant 1 : index
    %c0_8 = arith.constant 0 : index
    %c0_9 = arith.constant 0 : index
    %11 = vector.load %arg2[%c1, %c0_8, %c0_9] : memref<2x128x128xbf16, #tpu.memory_space<vmem>>, vector<1x128x128xbf16>
    %12 = vector.shape_cast %11 : vector<1x128x128xbf16> to vector<128x128xbf16>
    %cst_10 = arith.constant dense<0.000000e+00> : vector<16x128xf32>
    %13 = tpu.matmul %10, %12, %cst_10 {dimension_numbers = #tpu.dot_dimension_numbers<[1], [0], [0], [1], [0, 0, 1, 1], [], []>} : vector<16x128xbf16>, vector<128x128xbf16>, vector<16x128xf32> -> vector<16x128xf32>
    %c1_11 = arith.constant 1 : index
    %c0_12 = arith.constant 0 : index
    %c0_13 = arith.constant 0 : index
    %14 = vector.load %arg3[%c1_11, %c0_12, %c0_13] : memref<2x1x128xf32, #tpu.memory_space<vmem>>, vector<1x1x128xf32>
    %15 = vector.shape_cast %14 : vector<1x1x128xf32> to vector<1x128xf32>
    %16 = vector.broadcast %15 : vector<1x128xf32> to vector<16x128xf32>
    %17 = arith.addf %13, %16 : vector<16x128xf32>
    %cst_14 = arith.constant 0.000000e+00 : f32
    %18 = vector.broadcast %cst_14 : f32 to vector<16x128xf32>
    %19 = arith.maximumf %17, %18 : vector<16x128xf32>
    %20 = arith.truncf %19 : vector<16x128xf32> to vector<16x128xbf16>
    %c0_15 = arith.constant 0 : index
    %c0_16 = arith.constant 0 : index
    %21 = vector.load %arg4[%c0_15, %c0_16] : memref<128x64xbf16, #tpu.memory_space<vmem>>, vector<128x64xbf16>
    %cst_17 = arith.constant dense<0.000000e+00> : vector<16x64xf32>
    %22 = tpu.matmul %20, %21, %cst_17 {dimension_numbers = #tpu.dot_dimension_numbers<[1], [0], [0], [1], [0, 0, 1, 1], [], []>} : vector<16x128xbf16>, vector<128x64xbf16>, vector<16x64xf32> -> vector<16x64xf32>
    %c0_18 = arith.constant 0 : index
    %c0_19 = arith.constant 0 : index
    %23 = vector.load %arg5[%c0_18, %c0_19] : memref<1x64xf32, #tpu.memory_space<vmem>>, vector<1x64xf32>
    %24 = vector.broadcast %23 : vector<1x64xf32> to vector<16x64xf32>
    %25 = arith.addf %22, %24 : vector<16x64xf32>
    %c0_20 = arith.constant 0 : index
    %c0_21 = arith.constant 0 : index
    %26 = vector.load %arg6[%c0_20, %c0_21] : memref<16x64xf32, #tpu.memory_space<vmem>>, vector<16x64xf32>
    tpu.vector_store %arg6[%c0_20, %c0_21], %25 {strides = array<i32>} : memref<16x64xf32, #tpu.memory_space<vmem>>, vector<16x64xf32>,
    return
  }
  func.func @transform_0(%arg0: i32) -> (i32, i32) {
    %c0_i32 = arith.constant 0 : i32
    %c0_i32_0 = arith.constant 0 : i32
    return %arg0, %c0_i32 : i32, i32
  }
  func.func @transform_1(%arg0: i32) -> (i32, i32, i32) {
    %c0_i32 = arith.constant 0 : i32
    %c0_i32_0 = arith.constant 0 : i32
    %c0_i32_1 = arith.constant 0 : i32
    %c0_i32_2 = arith.constant 0 : i32
    return %c0_i32, %c0_i32_0, %c0_i32_1 : i32, i32, i32
  }
  func.func @transform_2(%arg0: i32) -> (i32, i32, i32) {
    %c0_i32 = arith.constant 0 : i32
    %c0_i32_0 = arith.constant 0 : i32
    %c0_i32_1 = arith.constant 0 : i32
    %c0_i32_2 = arith.constant 0 : i32
    return %c0_i32, %c0_i32_0, %c0_i32_1 : i32, i32, i32
  }
  func.func @transform_3(%arg0: i32) -> (i32, i32) {
    %c0_i32 = arith.constant 0 : i32
    %c0_i32_0 = arith.constant 0 : i32
    %c0_i32_1 = arith.constant 0 : i32
    return %c0_i32, %c0_i32_0 : i32, i32
  }
  func.func @transform_4(%arg0: i32) -> (i32, i32) {
    %c0_i32 = arith.constant 0 : i32
    %c0_i32_0 = arith.constant 0 : i32
    %c0_i32_1 = arith.constant 0 : i32
    return %c0_i32, %c0_i32_0 : i32, i32
  }
  func.func @transform_5(%arg0: i32) -> (i32, i32) {
    %c0_i32 = arith.constant 0 : i32
    %c0_i32_0 = arith.constant 0 : i32
    return %arg0, %c0_i32 : i32, i32
  }
}

</mosaic_0001>

<llo_original>
// kernel: tpu_custom_call.1
$region0: #{tpu_custom_call.1}
  #allocation0 [shape = 'u32[]', space=smem, size = 0x4, offset = 0x4, fixed_abs, tag = 'smem constant byte address 0x4 - core index']
  #allocation1 [shape = 'u32[144,128]{1,0:T(1,128)}', space=vmem, size = 0x12000, scoped, tag = 'internal scratch']
  %s0 = inlined_call_operand.vmem [shape: bf16[16,128], index: 0, kind: input, shape index: {}]
  %s1 = inlined_call_operand.hbm [shape: bf16[2,128,128], index: 1, kind: input, shape index: {}]
  %s2 = inlined_call_operand.vmem [shape: f32[2,1,128], index: 2, kind: input, shape index: {}]
  %s3 = inlined_call_operand.vmem [shape: bf16[128,64], index: 3, kind: input, shape index: {}]
  %s4 = inlined_call_operand.vmem [shape: f32[1,64], index: 4, kind: input, shape index: {}]
  %s5 = inlined_call_operand.hbm [shape: f32[16,64], index: 5, kind: output, shape index: {}]
  %s6 = sld [smem:[#allocation0]]
  $region34: #{tpu_custom_call.1} parent=0
    _
  %s8 = ssub.s32 1, %s6
  %s9 = scalar_select 0, %s8, %s6
  $region1: #{tpu_custom_call.1} parent=0
    #allocation2 [shape = 'u8[65536]{0}', space=vmem, size = 0x10000, scoped, tag = 'input window, operand 1, single buffered']
    #allocation3 [shape = 's32[1]{0}', space=sflag, size = 0x4, scoped, tag = 'scoped memory for tpu_custom_call.1']
    #allocation4 [shape = 's32[1]{0}', space=sflag, size = 0x4, scoped, tag = 'scoped memory for tpu_custom_call.1']
    #allocation5 [shape = 'u8[8192]{0}', space=vmem, size = 0x2000, scoped, tag = 'output window, operand 0, single buffered']
    %10 = vsyncpa [#allocation3], 0
    %11 = vsyncpa [#allocation4], 0
    // Predicated region
    $region2: #{tpu_custom_call.1} parent=1 // pred_check
      _
    $region3: #{tpu_custom_call.1} parent=1 // pred_check_branch
      %13 = sbr.rel (0) target = $region5
    $region4: #{tpu_custom_call.1} parent=1 // pred_region
      _
    $region5: #{tpu_custom_call.1} parent=1 // pred_fallthru
      _
    // Predicated region
    $region6: #{tpu_custom_call.1} parent=1 // pred_check
      _
    $region7: #{tpu_custom_call.1} parent=1 // pred_check_branch
      %15 = sbr.rel (0) target = $region9
    $region8: #{tpu_custom_call.1} parent=1 // pred_region
      %s17 = ssub.s32 2048, 2048
      %18 = vsyncadd [#allocation3], %s17
      %s19 = sshll.u32 [#allocation2], 4
      %s20 = int_to_ptr.vmem [resolvable:$true] %s19
      %25 = dma.hbm_to_vmem [thread:$0]  %s1, 2048, %s20, [#allocation3], 64, 64, 4
    $region9: #{tpu_custom_call.1} parent=1 // pred_fallthru
      _
    // Predicated region
    $region10: #{tpu_custom_call.1} parent=1 // pred_check
      _
    $region11: #{tpu_custom_call.1} parent=1 // pred_check_branch
      %27 = sbr.rel (0) target = $region13
    $region12: #{tpu_custom_call.1} parent=1 // pred_region
      _
    $region13: #{tpu_custom_call.1} parent=1 // pred_fallthru
      _
    // Predicated region
    $region14: #{tpu_custom_call.1} parent=1 // pred_check
      _
    $region15: #{tpu_custom_call.1} parent=1 // pred_check_branch
      %29 = sbr.rel (0) target = $region17
    $region16: #{tpu_custom_call.1} parent=1 // pred_region
      _
    $region17: #{tpu_custom_call.1} parent=1 // pred_fallthru
      _
    // Predicated region
    $region18: #{tpu_custom_call.1} parent=1 // pred_check
      _
    $region19: #{tpu_custom_call.1} parent=1 // pred_check_branch
      %31 = sbr.rel (0) target = $region21
    $region20: #{tpu_custom_call.1} parent=1 // pred_region
      _
    $region21: #{tpu_custom_call.1} parent=1 // pred_fallthru
      _
    // Predicated region
    $region22: #{tpu_custom_call.1} parent=1 // pred_check
      _
    $region23: #{tpu_custom_call.1} parent=1 // pred_check_branch
      %33 = sbr.rel (0) target = $region25
    $region24: #{tpu_custom_call.1} parent=1 // pred_region
      %34 = dma.done [#allocation3], 2048
    $region25: #{tpu_custom_call.1} parent=1 // pred_fallthru
      _
    %v36 = vld [vmem:[%s0] sm:$0xf]
    %v37 = vld [vmem:[%s0 + $0x4] sm:$0xf]
    %v38 = vld [vmem:[#allocation2] sm:$0xf]
    %v39 = vld [vmem:[#allocation2 + $0x4] sm:$0xf]
    %v40 = vld [vmem:[#allocation2 + $0x8] sm:$0xf]
    %v41 = vld [vmem:[#allocation2 + $0xc] sm:$0xf]
    %v42 = vld [vmem:[#allocation2 + $0x10] sm:$0xf]
    %v43 = vld [vmem:[#allocation2 + $0x14] sm:$0xf]
    %v44 = vld [vmem:[#allocation2 + $0x18] sm:$0xf]
    %v45 = vld [vmem:[#allocation2 + $0x1c] sm:$0xf]
    %v46 = vld [vmem:[#allocation2 + $0x20] sm:$0xf]
    %v47 = vld [vmem:[#allocation2 + $0x24] sm:$0xf]
    %v48 = vld [vmem:[#allocation2 + $0x28] sm:$0xf]
    %v49 = vld [vmem:[#allocation2 + $0x2c] sm:$0xf]
    %v50 = vld [vmem:[#allocation2 + $0x30] sm:$0xf]
    %v51 = vld [vmem:[#allocation2 + $0x34] sm:$0xf]
    %v52 = vld [vmem:[#allocation2 + $0x38] sm:$0xf]
    %v53 = vld [vmem:[#allocation2 + $0x3c] sm:$0xf]
    %v54 = vld [vmem:[%s2] sm:$0x1]
    %v56 = vlaneseq
    %v57 = vshrl.u32 %v56, 7
    %v58 = vsub.s32 0, %v57
    %v59 = vrot.slane %v54, %v58
    %v63 = vunpack.c.l.b16 %v36
    %v64 = vunpack.c.l.b16 %v37
    %v65 = vpack.c.b16 %v64, %v63
    %v83 = vunpack.c.l.b16 %v38
    %v84 = vunpack.c.l.b16 %v39
    %v85 = vunpack.c.l.b16 %v40
    %v86 = vunpack.c.l.b16 %v41
    %v87 = vunpack.c.l.b16 %v42
    %v88 = vunpack.c.l.b16 %v43
    %v89 = vunpack.c.l.b16 %v44
    %v90 = vunpack.c.l.b16 %v45
    %v91 = vunpack.c.l.b16 %v46
    %v92 = vunpack.c.l.b16 %v47
    %v93 = vunpack.c.l.b16 %v48
    %v94 = vunpack.c.l.b16 %v49
    %v95 = vunpack.c.l.b16 %v50
    %v96 = vunpack.c.l.b16 %v51
    %v97 = vunpack.c.l.b16 %v52
    %v98 = vunpack.c.l.b16 %v53
    %v99 = vpack.c.b16 %v84, %v83
    %v100 = vpack.c.b16 %v86, %v85
    %v101 = vpack.c.b16 %v88, %v87
    %v102 = vpack.c.b16 %v90, %v89
    %v103 = vpack.c.b16 %v92, %v91
    %v104 = vpack.c.b16 %v94, %v93
    %v105 = vpack.c.b16 %v96, %v95
    %v106 = vpack.c.b16 %v98, %v97
    %115 = vmatprep.subr.bf16.mxu0 0
    %116 = vmatpush1.bf16.msra.mxu0 %v106
    %117 = vmatprep.subr.bf16.mxu0 0
    %118 = vmatpush1.bf16.msra.mxu0 %v105
    %119 = vmatprep.subr.bf16.mxu0 0
    %120 = vmatpush1.bf16.msra.mxu0 %v104
    %121 = vmatprep.subr.bf16.mxu0 0
    %122 = vmatpush1.bf16.msra.mxu0 %v103
    %123 = vmatprep.subr.bf16.mxu0 0
    %124 = vmatpush1.bf16.msra.mxu0 %v102
    %125 = vmatprep.subr.bf16.mxu0 0
    %126 = vmatpush1.bf16.msra.mxu0 %v101
    %127 = vmatprep.subr.bf16.mxu0 0
    %128 = vmatpush1.bf16.msra.mxu0 %v100
    %129 = vmatprep.subr.bf16.mxu0 0
    %130 = vmatpush1.bf16.msra.mxu0 %v99
    %131 = vmatprep.subr.bf16.mxu0 0
    %132 = vmatpush2.bf16.msra.mxu0 0
    %133 = vmatprep.subr.bf16.mxu0 0
    %134 = vmatpush2.bf16.msra.mxu0 0
    %135 = vmatprep.subr.bf16.mxu0 0
    %136 = vmatpush2.bf16.msra.mxu0 0
    %137 = vmatprep.subr.bf16.mxu0 0
    %138 = vmatpush2.bf16.msra.mxu0 0
    %139 = vmatprep.subr.bf16.mxu0 0
    %140 = vmatpush2.bf16.msra.mxu0 0
    %141 = vmatprep.subr.bf16.mxu0 0
    %142 = vmatpush2.bf16.msra.mxu0 0
    %143 = vmatprep.subr.bf16.mxu0 0
    %144 = vmatpush2.bf16.msra.mxu0 0
    %145 = vmatprep.subr.bf16.mxu0 0
    %146 = vmatpush2.bf16.msra.mxu0 0
    %147 = vmatprep.mubr.bf16.mxu0 0
    %148 = vmatmul.mubr.bf16.gmra.mxu0 %v65
    %v149 = vpop.f32.mrf.mxu0
    %v150 = vadd.f32 %v59, %v149
    %v151 = vpop.f32.mrf.mxu0
    %v152 = vpop.f32.mrf.mxu0
    %v153 = vadd.f32 %v59, %v152
    %v154 = vpop.f32.mrf.mxu0
    %155 = vdwg.mxu0
    %v156 = vmax.f32 %v150, 0.0
    %v157 = vmax.f32 %v153, 0.0
    %v158 = vpack.c.bf16 %v157, %v156
    %s159 = scalar_lea.vmem [#allocation2], 64
    %v160 = vld [vmem:[%s159] sm:$0xf]
    %v161 = vld [vmem:[%s159 + $0x4] sm:$0xf]
    %v162 = vld [vmem:[%s159 + $0x8] sm:$0xf]
    %v163 = vld [vmem:[%s159 + $0xc] sm:$0xf]
    %v164 = vld [vmem:[%s159 + $0x10] sm:$0xf]
    %v165 = vld [vmem:[%s159 + $0x14] sm:$0xf]
    %v166 = vld [vmem:[%s159 + $0x18] sm:$0xf]
    %v167 = vld [vmem:[%s159 + $0x1c] sm:$0xf]
    %v168 = vld [vmem:[%s159 + $0x20] sm:$0xf]
    %v169 = vld [vmem:[%s159 + $0x24] sm:$0xf]
    %v170 = vld [vmem:[%s159 + $0x28] sm:$0xf]
    %v171 = vld [vmem:[%s159 + $0x2c] sm:$0xf]
    %v172 = vld [vmem:[%s159 + $0x30] sm:$0xf]
    %v173 = vld [vmem:[%s159 + $0x34] sm:$0xf]
    %v174 = vld [vmem:[%s159 + $0x38] sm:$0xf]
    %v175 = vld [vmem:[%s159 + $0x3c] sm:$0xf]
    %s176 = scalar_lea.vmem %s2, 1
    %v177 = vld [vmem:[%s176] sm:$0x1]
    %v179 = vlaneseq
    %v180 = vshrl.u32 %v179, 7
    %v181 = vsub.s32 0, %v180
    %v182 = vrot.slane %v177, %v181
    %v200 = vunpack.c.l.b16 %v160
    %v201 = vunpack.c.l.b16 %v161
    %v202 = vunpack.c.l.b16 %v162
    %v203 = vunpack.c.l.b16 %v163
    %v204 = vunpack.c.l.b16 %v164
    %v205 = vunpack.c.l.b16 %v165
    %v206 = vunpack.c.l.b16 %v166
    %v207 = vunpack.c.l.b16 %v167
    %v208 = vunpack.c.l.b16 %v168
    %v209 = vunpack.c.l.b16 %v169
    %v210 = vunpack.c.l.b16 %v170
    %v211 = vunpack.c.l.b16 %v171
    %v212 = vunpack.c.l.b16 %v172
    %v213 = vunpack.c.l.b16 %v173
    %v214 = vunpack.c.l.b16 %v174
    %v215 = vunpack.c.l.b16 %v175
    %v216 = vpack.c.b16 %v201, %v200
    %v217 = vpack.c.b16 %v203, %v202
    %v218 = vpack.c.b16 %v205, %v204
    %v219 = vpack.c.b16 %v207, %v206
    %v220 = vpack.c.b16 %v209, %v208
    %v221 = vpack.c.b16 %v211, %v210
    %v222 = vpack.c.b16 %v213, %v212
    %v223 = vpack.c.b16 %v215, %v214
    %232 = vmatprep.subr.bf16.mxu0 0
    %233 = vmatpush1.bf16.msra.mxu0 %v223
    %234 = vmatprep.subr.bf16.mxu0 0
    %235 = vmatpush1.bf16.msra.mxu0 %v222
    %236 = vmatprep.subr.bf16.mxu0 0
    %237 = vmatpush1.bf16.msra.mxu0 %v221
    %238 = vmatprep.subr.bf16.mxu0 0
    %239 = vmatpush1.bf16.msra.mxu0 %v220
    %240 = vmatprep.subr.bf16.mxu0 0
    %241 = vmatpush1.bf16.msra.mxu0 %v219
    %242 = vmatprep.subr.bf16.mxu0 0
    %243 = vmatpush1.bf16.msra.mxu0 %v218
    %244 = vmatprep.subr.bf16.mxu0 0
    %245 = vmatpush1.bf16.msra.mxu0 %v217
    %246 = vmatprep.subr.bf16.mxu0 0
    %247 = vmatpush1.bf16.msra.mxu0 %v216
    %248 = vmatprep.subr.bf16.mxu0 0
    %249 = vmatpush2.bf16.msra.mxu0 0
    %250 = vmatprep.subr.bf16.mxu0 0
    %251 = vmatpush2.bf16.msra.mxu0 0
    %252 = vmatprep.subr.bf16.mxu0 0
    %253 = vmatpush2.bf16.msra.mxu0 0
    %254 = vmatprep.subr.bf16.mxu0 0
    %255 = vmatpush2.bf16.msra.mxu0 0
    %256 = vmatprep.subr.bf16.mxu0 0
    %257 = vmatpush2.bf16.msra.mxu0 0
    %258 = vmatprep.subr.bf16.mxu0 0
    %259 = vmatpush2.bf16.msra.mxu0 0
    %260 = vmatprep.subr.bf16.mxu0 0
    %261 = vmatpush2.bf16.msra.mxu0 0
    %262 = vmatprep.subr.bf16.mxu0 0
    %263 = vmatpush2.bf16.msra.mxu0 0
    %264 = vmatprep.mubr.bf16.mxu0 0
    %265 = vmatmul.mubr.bf16.gmra.mxu0 %v158
    %v266 = vpop.f32.mrf.mxu0
    %v267 = vadd.f32 %v182, %v266
    %v268 = vpop.f32.mrf.mxu0
    %v269 = vpop.f32.mrf.mxu0
    %v270 = vadd.f32 %v182, %v269
    %v271 = vpop.f32.mrf.mxu0
    %272 = vdwg.mxu0
    %v273 = vmax.f32 %v267, 0.0
    %v274 = vmax.f32 %v270, 0.0
    %v275 = vpack.c.bf16 %v274, %v273
    %v276 = vld [vmem:[%s3] sm:$0xf]
    %v277 = vld [vmem:[%s3 + $0x4] sm:$0xf]
    %v278 = vld [vmem:[%s3 + $0x8] sm:$0xf]
    %v279 = vld [vmem:[%s3 + $0xc] sm:$0xf]
    %v280 = vld [vmem:[%s3 + $0x10] sm:$0xf]
    %v281 = vld [vmem:[%s3 + $0x14] sm:$0xf]
    %v282 = vld [vmem:[%s3 + $0x18] sm:$0xf]
    %v283 = vld [vmem:[%s3 + $0x1c] sm:$0xf]
    %v284 = vld [vmem:[%s3 + $0x20] sm:$0xf]
    %v285 = vld [vmem:[%s3 + $0x24] sm:$0xf]
    %v286 = vld [vmem:[%s3 + $0x28] sm:$0xf]
    %v287 = vld [vmem:[%s3 + $0x2c] sm:$0xf]
    %v288 = vld [vmem:[%s3 + $0x30] sm:$0xf]
    %v289 = vld [vmem:[%s3 + $0x34] sm:$0xf]
    %v290 = vld [vmem:[%s3 + $0x38] sm:$0xf]
    %v291 = vld [vmem:[%s3 + $0x3c] sm:$0xf]
    %v292 = vld [vmem:[%s4] sm:$0x1]
    %v294 = vlaneseq
    %v295 = vshrl.u32 %v294, 7
    %v296 = vsub.s32 0, %v295
    %v297 = vrot.slane %v292, %v296
    %v315 = vunpack.c.l.b16 %v276
    %v316 = vunpack.c.l.b16 %v277
    %v317 = vunpack.c.l.b16 %v278
    %v318 = vunpack.c.l.b16 %v279
    %v319 = vunpack.c.l.b16 %v280
    %v320 = vunpack.c.l.b16 %v281
    %v321 = vunpack.c.l.b16 %v282
    %v322 = vunpack.c.l.b16 %v283
    %v323 = vunpack.c.l.b16 %v284
    %v324 = vunpack.c.l.b16 %v285
    %v325 = vunpack.c.l.b16 %v286
    %v326 = vunpack.c.l.b16 %v287
    %v327 = vunpack.c.l.b16 %v288
    %v328 = vunpack.c.l.b16 %v289
    %v329 = vunpack.c.l.b16 %v290
    %v330 = vunpack.c.l.b16 %v291
    %v331 = vpack.c.b16 %v316, %v315
    %v332 = vpack.c.b16 %v318, %v317
    %v333 = vpack.c.b16 %v320, %v319
    %v334 = vpack.c.b16 %v322, %v321
    %v335 = vpack.c.b16 %v324, %v323
    %v336 = vpack.c.b16 %v326, %v325
    %v337 = vpack.c.b16 %v328, %v327
    %v338 = vpack.c.b16 %v330, %v329
    %347 = vmatprep.subr.bf16.mxu0 0
    %348 = vmatpush1.bf16.msra.mxu0 %v338
    %349 = vmatprep.subr.bf16.mxu0 0
    %350 = vmatpush1.bf16.msra.mxu0 %v337
    %351 = vmatprep.subr.bf16.mxu0 0
    %352 = vmatpush1.bf16.msra.mxu0 %v336
    %353 = vmatprep.subr.bf16.mxu0 0
    %354 = vmatpush1.bf16.msra.mxu0 %v335
    %355 = vmatprep.subr.bf16.mxu0 0
    %356 = vmatpush1.bf16.msra.mxu0 %v334
    %357 = vmatprep.subr.bf16.mxu0 0
    %358 = vmatpush1.bf16.msra.mxu0 %v333
    %359 = vmatprep.subr.bf16.mxu0 0
    %360 = vmatpush1.bf16.msra.mxu0 %v332
    %361 = vmatprep.subr.bf16.mxu0 0
    %362 = vmatpush1.bf16.msra.mxu0 %v331
    %363 = vmatprep.subr.bf16.mxu0 0
    %364 = vmatpush2.bf16.msra.mxu0 0
    %365 = vmatprep.subr.bf16.mxu0 0
    %366 = vmatpush2.bf16.msra.mxu0 0
    %367 = vmatprep.subr.bf16.mxu0 0
    %368 = vmatpush2.bf16.msra.mxu0 0
    %369 = vmatprep.subr.bf16.mxu0 0
    %370 = vmatpush2.bf16.msra.mxu0 0
    %371 = vmatprep.subr.bf16.mxu0 0
    %372 = vmatpush2.bf16.msra.mxu0 0
    %373 = vmatprep.subr.bf16.mxu0 0
    %374 = vmatpush2.bf16.msra.mxu0 0
    %375 = vmatprep.subr.bf16.mxu0 0
    %376 = vmatpush2.bf16.msra.mxu0 0
    %377 = vmatprep.subr.bf16.mxu0 0
    %378 = vmatpush2.bf16.msra.mxu0 0
    %379 = vmatprep.mubr.bf16.mxu0 0
    %380 = vmatmul.mubr.bf16.gmra.mxu0 %v275
    %v381 = vpop.f32.mrf.mxu0
    %v382 = vadd.f32 %v297, %v381
    %v383 = vpop.f32.mrf.mxu0
    %v384 = vpop.f32.mrf.mxu0
    %v385 = vadd.f32 %v297, %v384
    %v386 = vpop.f32.mrf.mxu0
    %387 = vdwg.mxu0
    %vm388 = vcmask 523264
    %389 = vst.msk [vmem:[#allocation5] sm:$0xff] %vm388, %v382
    %390 = vst.msk [vmem:[#allocation5 + $0x8] sm:$0xff] %vm388, %v385
    // Predicated region
    $region26: #{tpu_custom_call.1} parent=1 // pred_check
      _
    $region27: #{tpu_custom_call.1} parent=1 // pred_check_branch
      %392 = sbr.rel (0) target = $region29
    $region28: #{tpu_custom_call.1} parent=1 // pred_region
      %s394 = ssub.s32 256, 256
      %395 = vsyncadd [#allocation4], %s394
      %s396 = sshll.u32 [#allocation5], 4
      %s397 = int_to_ptr.vmem [resolvable:$true] %s396
      %402 = dma.vmem_to_hbm [thread:$0]  %s397, 256, %s5, [#allocation4], 128, 128, 8
    $region29: #{tpu_custom_call.1} parent=1 // pred_fallthru
      _
    // Predicated region
    $region30: #{tpu_custom_call.1} parent=1 // pred_check
      _
    $region31: #{tpu_custom_call.1} parent=1 // pred_check_branch
      %404 = sbr.rel (0) target = $region33
    $region32: #{tpu_custom_call.1} parent=1 // pred_region
      %405 = dma.done [#allocation4], 256
    $region33: #{tpu_custom_call.1} parent=1 // pred_fallthru
      _
    %406 = vsyncpa [#allocation3], 1
    %407 = vsyncpa [#allocation4], 1

</llo_original>
